<compile_context>
chip_gen: v6e
topology: v6e:2x2x1
jax: 0.10.0
libtpu: 0.0.40
codegen_flags: <defaults>
</compile_context>

<pallas_src>
import functools
import math

import jax
import jax.numpy as jnp
from jax import lax
from jax.experimental import pallas as pl
from jax.experimental.pallas import tpu as pltpu


# ---------------------------------------------------------------------------
# Fused kernel: one batch element per grid step.
#   adj_ref   : (1, V, V)                    raw adjacency (normalised in-kernel)
#   x_ref     : (1, V, C*L)                  input in r-layout
#   w_hop_ref : (C*L, C*L)                   kron(I_C, W_hgnn)    (replicated)
#   b_hop_ref : (1, C*L)                     tile(b_hgnn, C)      (replicated)
#   w_head_ref: (gdep+1, C*L, C_out*L)       per-hop head weights (replicated)
#   b_head_ref: (1, C_out*L)                 repeat(b_mlp, L)     (replicated)
#   o_ref     : (1, V, C_out*L)              output in r-layout
# ---------------------------------------------------------------------------
def _fused_residualconv_kernel(adj_ref, x_ref, w_hop_ref, b_hop_ref,
                               w_head_ref, b_head_ref, o_ref, *, gdep, alpha):
    V = adj_ref.shape[1]

    # a = (adj + I) / colsum(adj + I)   (matches torch: d = adj_new.sum(1))
    adj = adj_ref[0].astype(jnp.float32)                          # (V, V)
    row = lax.broadcasted_iota(jnp.int32, (V, V), 0)
    col = lax.broadcasted_iota(jnp.int32, (V, V), 1)
    a = adj + (row == col).astype(jnp.float32)
    a = a / jnp.sum(a, axis=0, keepdims=True)                     # column-normalise

    x = x_ref[0].astype(jnp.float32)                              # (V, C*L)
    w_hop = w_hop_ref[...].astype(jnp.float32)                    # (C*L, C*L)
    b_hop = b_hop_ref[...].astype(jnp.float32)                    # (1, C*L)

    # Hop 0 contribution of the 1x1-conv head (out list starts with h0 = x).
    h = x
    y = jnp.dot(h, w_head_ref[0].astype(jnp.float32),
                preferred_element_type=jnp.float32)               # (V, C_out*L)

    for i in range(gdep):                                         # static, fully unrolled
        # Feature transform: per-channel (.,L)@(L,L) expressed as one block-diagonal matmul.
        t = jnp.dot(h, w_hop, preferred_element_type=jnp.float32) + b_hop
        # Hypergraph aggregation: single lane-dense MXU matmul (V,V)@(V,C*L).
        z = jnp.dot(a, t, preferred_element_type=jnp.float32)
        # Residual mix with the original x.
        h = alpha * x + (1.0 - alpha) * z
        # Accumulate this hop's head contribution (avoids ever materialising ho).
        y = y + jnp.dot(h, w_head_ref[i + 1].astype(jnp.float32),
                        preferred_element_type=jnp.float32)

    o_ref[0] = (y + b_head_ref[...]).astype(o_ref.dtype)


# ---------------------------------------------------------------------------
# residualconv forward
# ---------------------------------------------------------------------------
def residualconv_forward(x, adj, params, *, gdep, alpha):
    N, C, V, L = x.shape
    w_h, b_h = params["hgnn_w"], params["hgnn_b"]       # (L, L), (L,)
    w_m, b_m = params["mlp_w"], params["mlp_b"]          # (C_out, (gdep+1)*C), (C_out,)
    assert w_h.shape[0] == w_h.shape[1] == L, "residual mix requires c_in == c_out"
    C_out = w_m.shape[0]
    CL = C * L
    CoL = C_out * L

    # r-layout: (N, C, V, L) -> (N, V, C*L).  Only x and the final y are transposed (layout
    # plumbing on the smallest tensors); all hop intermediates stay in VMEM.
    x_r = jnp.transpose(x, (0, 2, 1, 3)).reshape(N, V, CL)

    # Block-diagonal HGNN weight: applying W_h to each channel == one (C*L, C*L) matmul.
    w_hop = jnp.kron(jnp.eye(C, dtype=w_h.dtype), w_h)            # (CL, CL)
    b_hop = jnp.tile(b_h, C).reshape(1, CL)

    # 1x1-conv head in r-layout:  y_r = ho_r @ kron(W_mlp.T, I_L) + repeat(b_mlp, L).
    # Rows of the kron are hop-major, so reshape to (gdep+1, CL, CoL) for per-hop accumulation.
    w_head = jnp.kron(w_m.T, jnp.eye(L, dtype=w_m.dtype)).reshape(gdep + 1, CL, CoL)
    b_head = jnp.repeat(b_m, L).reshape(1, CoL)

    kernel = functools.partial(_fused_residualconv_kernel, gdep=gdep, alpha=alpha)
    y_r = pl.pallas_call(
        kernel,
        out_shape=jax.ShapeDtypeStruct((N, V, CoL), jnp.float32),
        grid_spec=pltpu.PrefetchScalarGridSpec(
            num_scalar_prefetch=0,
            grid=(N,),
            in_specs=[
                pl.BlockSpec((1, V, V), lambda n: (n, 0, 0)),          # adj[n]
                pl.BlockSpec((1, V, CL), lambda n: (n, 0, 0)),         # x_r[n]
                pl.BlockSpec((CL, CL), lambda n: (0, 0)),              # w_hop (replicated)
                pl.BlockSpec((1, CL), lambda n: (0, 0)),               # b_hop (replicated)
                pl.BlockSpec((gdep + 1, CL, CoL), lambda n: (0, 0, 0)),  # w_head (replicated)
                pl.BlockSpec((1, CoL), lambda n: (0, 0)),              # b_head (replicated)
            ],
            out_specs=pl.BlockSpec((1, V, CoL), lambda n: (n, 0, 0)),
        ),
        compiler_params=pltpu.CompilerParams(
            dimension_semantics=("parallel",),          # shards batches across v7x's 2 TCs
            vmem_limit_bytes=32 * 1024 * 1024,          # explicit; blocks here are << 1 MiB
        ),
    )(adj, x_r, w_hop, b_hop, w_head, b_head)

    # (N, V, C_out*L) -> (N, C_out, V, L)
    return jnp.transpose(y_r.reshape(N, V, C_out, L), (0, 2, 1, 3))


# ---------------------------------------------------------------------------
# Pure-JAX reference (mirrors the PyTorch module) for the correctness check.
# ---------------------------------------------------------------------------
def residualconv_reference(x, adj, params, *, gdep, alpha):
    w_h, b_h = params["hgnn_w"], params["hgnn_b"]
    w_m, b_m = params["mlp_w"], params["mlp_b"]
    N, C, V, L = x.shape
    adj_new = adj + jnp.eye(V, dtype=adj.dtype)[None]
    d = adj_new.sum(axis=1)[:, None, :]                  # torch: adj_new.sum(1).view(N,1,V)
    a = adj_new / d
    h = x
    outs = [h]
    for _ in range(gdep):
        t = jnp.einsum("ncwl,lk->ncwk", h, w_h) + b_h
        z = jnp.einsum("ncwl,nvw->ncvl", t, a)
        h = alpha * x + (1.0 - alpha) * z
        outs.append(h)
    ho = jnp.concatenate(outs, axis=1)
    return jnp.einsum("ncvl,oc->novl", ho, w_m) + b_m[None, :, None, None]


if __name__ == "__main__":
    # Small, self-consistent sizes: residual mix requires c_in == c_out.
    N, c_in, c_out, V, num_patterns, gdep, alpha = 2, 4, 4, 16, 8, 2, 0.05
    L = c_in * num_patterns                              # HGNN feature width (32) -> C*L = 128

    key = jax.random.PRNGKey(0)
    kx, ka, kw, kb, kwm, kbm = jax.random.split(key, 6)
    x = jax.random.normal(kx, (N, c_in, V, L), dtype=jnp.float32)
    adj = jax.random.uniform(ka, (N, V, V), dtype=jnp.float32)

    stdv = 1.0 / math.sqrt(L)
    params = {
        "hgnn_w": jax.random.uniform(kw, (L, L), jnp.float32, -stdv, stdv),
        "hgnn_b": jax.random.uniform(kb, (L,), jnp.float32, -stdv, stdv),
        "mlp_w": jax.random.uniform(kwm, (c_out, (gdep + 1) * c_in), jnp.float32, -0.5, 0.5),
        "mlp_b": jax.random.uniform(kbm, (c_out,), jnp.float32, -0.5, 0.5),
    }
    # Note: self.dropout and self.a_list are defined but never used in forward(); nothing to port.

    fwd = jax.jit(functools.partial(residualconv_forward, gdep=gdep, alpha=alpha))
    out = jax.block_until_ready(fwd(x, adj, params))

    ref = residualconv_reference(x, adj, params, gdep=gdep, alpha=alpha)
    assert out.shape == (N, c_out, V, L)
    err = float(jnp.max(jnp.abs(out - ref)))
    assert jnp.allclose(out, ref, atol=1e-3, rtol=1e-3), err
    print("KERNEL_OK")
</pallas_src>

<mosaic_0001>
module attributes {stable_mosaic.version = 11 : i64} {
  func.func @_fused_residualconv_kernel(%arg0: i32, %arg1: memref<1x16x16xf32, #tpu.memory_space<vmem>>, %arg2: memref<1x16x128xf32, #tpu.memory_space<vmem>>, %arg3: memref<128x128xf32, #tpu.memory_space<vmem>>, %arg4: memref<1x128xf32, #tpu.memory_space<vmem>>, %arg5: memref<3x128x128xf32, #tpu.memory_space<vmem>>, %arg6: memref<1x128xf32, #tpu.memory_space<vmem>>, %arg7: memref<1x16x128xf32, #tpu.memory_space<vmem>>) attributes {dimension_semantics = [#tpu.dimension_semantics<parallel>], iteration_bounds = array<i64: 2>, scalar_prefetch = 0 : i64, scratch_operands = 0 : i64, tpu.core_type = #tpu.core_type<tc>, window_params = [{transform_indices = @transform_0, window_bounds = array<i64: 1, 16, 16>}, {transform_indices = @transform_1, window_bounds = array<i64: 1, 16, 128>}, {pipeline_mode = #tpu.pipeline_mode<synchronous>, transform_indices = @transform_2, window_bounds = array<i64: 128, 128>}, {pipeline_mode = #tpu.pipeline_mode<synchronous>, transform_indices = @transform_3, window_bounds = array<i64: 1, 128>}, {pipeline_mode = #tpu.pipeline_mode<synchronous>, transform_indices = @transform_4, window_bounds = array<i64: 3, 128, 128>}, {pipeline_mode = #tpu.pipeline_mode<synchronous>, transform_indices = @transform_5, window_bounds = array<i64: 1, 128>}, {transform_indices = @transform_6, window_bounds = array<i64: 1, 16, 128>}]} {
    %c0 = arith.constant 0 : index
    %c0_0 = arith.constant 0 : index
    %c0_1 = arith.constant 0 : index
    %0 = vector.load %arg1[%c0, %c0_0, %c0_1] : memref<1x16x16xf32, #tpu.memory_space<vmem>>, vector<1x16x16xf32>
    %1 = vector.shape_cast %0 : vector<1x16x16xf32> to vector<16x16xf32>
    %2 = tpu.iota {dimensions = array<i32: 0>} : vector<16x16xi32>
    %3 = tpu.iota {dimensions = array<i32: 1>} : vector<16x16xi32>
    %4 = arith.cmpi eq, %2, %3 : vector<16x16xi32>
    %5 = arith.extui %4 : vector<16x16xi1> to vector<16x16xi32>
    %6 = arith.sitofp %5 : vector<16x16xi32> to vector<16x16xf32>
    %7 = arith.addf %1, %6 : vector<16x16xf32>
    %cst = arith.constant dense<0.000000e+00> : vector<16xf32>
    %8 = vector.multi_reduction <add>, %7, %cst [0] : vector<16x16xf32> to vector<16xf32>
    %9 = vector.shape_cast %8 : vector<16xf32> to vector<1x16xf32>
    %10 = vector.broadcast %9 : vector<1x16xf32> to vector<16x16xf32>
    %11 = arith.divf %7, %10 : vector<16x16xf32>
    %c0_2 = arith.constant 0 : index
    %c0_3 = arith.constant 0 : index
    %c0_4 = arith.constant 0 : index
    %12 = vector.load %arg2[%c0_2, %c0_3, %c0_4] : memref<1x16x128xf32, #tpu.memory_space<vmem>>, vector<1x16x128xf32>
    %13 = vector.shape_cast %12 : vector<1x16x128xf32> to vector<16x128xf32>
    %c0_5 = arith.constant 0 : index
    %c0_6 = arith.constant 0 : index
    %14 = vector.load %arg3[%c0_5, %c0_6] : memref<128x128xf32, #tpu.memory_space<vmem>>, vector<128x128xf32>
    %c0_7 = arith.constant 0 : index
    %c0_8 = arith.constant 0 : index
    %15 = vector.load %arg4[%c0_7, %c0_8] : memref<1x128xf32, #tpu.memory_space<vmem>>, vector<1x128xf32>
    %c0_9 = arith.constant 0 : index
    %c0_10 = arith.constant 0 : index
    %c0_11 = arith.constant 0 : index
    %16 = vector.load %arg5[%c0_9, %c0_10, %c0_11] : memref<3x128x128xf32, #tpu.memory_space<vmem>>, vector<1x128x128xf32>
    %17 = vector.shape_cast %16 : vector<1x128x128xf32> to vector<128x128xf32>
    %cst_12 = arith.constant dense<0.000000e+00> : vector<16x128xf32>
    %18 = tpu.matmul %13, %17, %cst_12 {dimension_numbers = #tpu.dot_dimension_numbers<[1], [0], [0], [1], [0, 0, 1, 1], [], []>} : vector<16x128xf32>, vector<128x128xf32>, vector<16x128xf32> -> vector<16x128xf32>
    %cst_13 = arith.constant dense<0.000000e+00> : vector<16x128xf32>
    %19 = tpu.matmul %13, %14, %cst_13 {dimension_numbers = #tpu.dot_dimension_numbers<[1], [0], [0], [1], [0, 0, 1, 1], [], []>} : vector<16x128xf32>, vector<128x128xf32>, vector<16x128xf32> -> vector<16x128xf32>
    %20 = vector.broadcast %15 : vector<1x128xf32> to vector<16x128xf32>
    %21 = arith.addf %19, %20 : vector<16x128xf32>
    %cst_14 = arith.constant dense<0.000000e+00> : vector<16x128xf32>
    %22 = tpu.matmul %11, %21, %cst_14 {dimension_numbers = #tpu.dot_dimension_numbers<[1], [0], [0], [1], [0, 0, 1, 1], [], []>} : vector<16x16xf32>, vector<16x128xf32>, vector<16x128xf32> -> vector<16x128xf32>
    %cst_15 = arith.constant 5.000000e-02 : f32
    %23 = vector.broadcast %cst_15 : f32 to vector<16x128xf32>
    %24 = arith.mulf %23, %13 : vector<16x128xf32>
    %cst_16 = arith.constant 0.949999988 : f32
    %25 = vector.broadcast %cst_16 : f32 to vector<16x128xf32>
    %26 = arith.mulf %25, %22 : vector<16x128xf32>
    %27 = arith.addf %24, %26 : vector<16x128xf32>
    %c1 = arith.constant 1 : index
    %c0_17 = arith.constant 0 : index
    %c0_18 = arith.constant 0 : index
    %28 = vector.load %arg5[%c1, %c0_17, %c0_18] : memref<3x128x128xf32, #tpu.memory_space<vmem>>, vector<1x128x128xf32>
    %29 = vector.shape_cast %28 : vector<1x128x128xf32> to vector<128x128xf32>
    %cst_19 = arith.constant dense<0.000000e+00> : vector<16x128xf32>
    %30 = tpu.matmul %27, %29, %cst_19 {dimension_numbers = #tpu.dot_dimension_numbers<[1], [0], [0], [1], [0, 0, 1, 1], [], []>} : vector<16x128xf32>, vector<128x128xf32>, vector<16x128xf32> -> vector<16x128xf32>
    %31 = arith.addf %18, %30 : vector<16x128xf32>
    %cst_20 = arith.constant dense<0.000000e+00> : vector<16x128xf32>
    %32 = tpu.matmul %27, %14, %cst_20 {dimension_numbers = #tpu.dot_dimension_numbers<[1], [0], [0], [1], [0, 0, 1, 1], [], []>} : vector<16x128xf32>, vector<128x128xf32>, vector<16x128xf32> -> vector<16x128xf32>
    %33 = vector.broadcast %15 : vector<1x128xf32> to vector<16x128xf32>
    %34 = arith.addf %32, %33 : vector<16x128xf32>
    %cst_21 = arith.constant dense<0.000000e+00> : vector<16x128xf32>
    %35 = tpu.matmul %11, %34, %cst_21 {dimension_numbers = #tpu.dot_dimension_numbers<[1], [0], [0], [1], [0, 0, 1, 1], [], []>} : vector<16x16xf32>, vector<16x128xf32>, vector<16x128xf32> -> vector<16x128xf32>
    %cst_22 = arith.constant 5.000000e-02 : f32
    %36 = vector.broadcast %cst_22 : f32 to vector<16x128xf32>
    %37 = arith.mulf %36, %13 : vector<16x128xf32>
    %cst_23 = arith.constant 0.949999988 : f32
    %38 = vector.broadcast %cst_23 : f32 to vector<16x128xf32>
    %39 = arith.mulf %38, %35 : vector<16x128xf32>
    %40 = arith.addf %37, %39 : vector<16x128xf32>
    %c2 = arith.constant 2 : index
    %c0_24 = arith.constant 0 : index
    %c0_25 = arith.constant 0 : index
    %41 = vector.load %arg5[%c2, %c0_24, %c0_25] : memref<3x128x128xf32, #tpu.memory_space<vmem>>, vector<1x128x128xf32>
    %42 = vector.shape_cast %41 : vector<1x128x128xf32> to vector<128x128xf32>
    %cst_26 = arith.constant dense<0.000000e+00> : vector<16x128xf32>
    %43 = tpu.matmul %40, %42, %cst_26 {dimension_numbers = #tpu.dot_dimension_numbers<[1], [0], [0], [1], [0, 0, 1, 1], [], []>} : vector<16x128xf32>, vector<128x128xf32>, vector<16x128xf32> -> vector<16x128xf32>
    %44 = arith.addf %31, %43 : vector<16x128xf32>
    %c0_27 = arith.constant 0 : index
    %c0_28 = arith.constant 0 : index
    %45 = vector.load %arg6[%c0_27, %c0_28] : memref<1x128xf32, #tpu.memory_space<vmem>>, vector<1x128xf32>
    %46 = vector.broadcast %45 : vector<1x128xf32> to vector<16x128xf32>
    %47 = arith.addf %44, %46 : vector<16x128xf32>
    %c0_29 = arith.constant 0 : index
    %c0_30 = arith.constant 0 : index
    %c0_31 = arith.constant 0 : index
    %48 = vector.load %arg7[%c0_29, %c0_30, %c0_31] : memref<1x16x128xf32, #tpu.memory_space<vmem>>, vector<1x16x128xf32>
    %49 = vector.shape_cast %48 : vector<1x16x128xf32> to vector<16x128xf32>
    %50 = vector.shape_cast %47 : vector<16x128xf32> to vector<1x16x128xf32>
    tpu.vector_store %arg7[%c0_29, %c0_30, %c0_31], %50 {strides = array<i32>} : memref<1x16x128xf32, #tpu.memory_space<vmem>>, vector<1x16x128xf32>,
    return
  }
  func.func @transform_0(%arg0: i32) -> (i32, i32, i32) {
    %c0_i32 = arith.constant 0 : i32
    %c0_i32_0 = arith.constant 0 : i32
    %c0_i32_1 = arith.constant 0 : i32
    return %arg0, %c0_i32, %c0_i32_0 : i32, i32, i32
  }
  func.func @transform_1(%arg0: i32) -> (i32, i32, i32) {
    %c0_i32 = arith.constant 0 : i32
    %c0_i32_0 = arith.constant 0 : i32
    %c0_i32_1 = arith.constant 0 : i32
    return %arg0, %c0_i32, %c0_i32_0 : i32, i32, i32
  }
  func.func @transform_2(%arg0: i32) -> (i32, i32) {
    %c0_i32 = arith.constant 0 : i32
    %c0_i32_0 = arith.constant 0 : i32
    %c0_i32_1 = arith.constant 0 : i32
    return %c0_i32, %c0_i32_0 : i32, i32
  }
  func.func @transform_3(%arg0: i32) -> (i32, i32) {
    %c0_i32 = arith.constant 0 : i32
    %c0_i32_0 = arith.constant 0 : i32
    %c0_i32_1 = arith.constant 0 : i32
    return %c0_i32, %c0_i32_0 : i32, i32
  }
  func.func @transform_4(%arg0: i32) -> (i32, i32, i32) {
    %c0_i32 = arith.constant 0 : i32
    %c0_i32_0 = arith.constant 0 : i32
    %c0_i32_1 = arith.constant 0 : i32
    %c0_i32_2 = arith.constant 0 : i32
    return %c0_i32, %c0_i32_0, %c0_i32_1 : i32, i32, i32
  }
  func.func @transform_5(%arg0: i32) -> (i32, i32) {
    %c0_i32 = arith.constant 0 : i32
    %c0_i32_0 = arith.constant 0 : i32
    %c0_i32_1 = arith.constant 0 : i32
    return %c0_i32, %c0_i32_0 : i32, i32
  }
  func.func @transform_6(%arg0: i32) -> (i32, i32, i32) {
    %c0_i32 = arith.constant 0 : i32
    %c0_i32_0 = arith.constant 0 : i32
    %c0_i32_1 = arith.constant 0 : i32
    return %arg0, %c0_i32, %c0_i32_0 : i32, i32, i32
  }
}

</mosaic_0001>

<llo_original>
// kernel: tile.8
$region0: #{tile.8}
  #allocation0 [shape = 's32[1]{0}', space=sflag, size = 0x4, scoped, tag = 'scoped memory for tile.8']
  %s0 = inlined_call_operand.vmem [shape: f32[32], index: 0, kind: input, shape index: {}]
  %s1 = inlined_call_operand.vmem [shape: f32[4,32], index: 1, kind: output, shape index: {}]
  // Predicated region
  $region2: #{tile.8} parent=0 // pred_check
    _
  $region3: #{tile.8} parent=0 // pred_check_branch
    %3 = sbr.rel (0) target = $region5
  $region4: #{tile.8} parent=0 // pred_region
    _
  $region5: #{tile.8} parent=0 // pred_fallthru
    _
  %v4 = vld [vmem:[%s0] ss:$0 sm:$0xff]
  %5 = vst [vmem:[%s1] sm:$0xf] %v4

// kernel: residualconv_forward.1
$region0: #{residualconv_forward.1}
  #allocation0 [shape = 'u32[]', space=smem, size = 0x4, offset = 0x4, fixed_abs, tag = 'smem constant byte address 0x4 - core index']
  #allocation1 [shape = 'u32[144,128]{1,0:T(1,128)}', space=vmem, size = 0x12000, scoped, tag = 'internal scratch']
  %s0 = inlined_call_operand.vmem [shape: f32[2,16,16], index: 0, kind: input, shape index: {}]
  %s1 = inlined_call_operand.vmem [shape: f32[2,16,128], index: 1, kind: input, shape index: {}]
  %s2 = inlined_call_operand.vmem [shape: f32[128,128], index: 2, kind: input, shape index: {}]
  %s3 = inlined_call_operand.vmem [shape: f32[1,128], index: 3, kind: input, shape index: {}]
  %s4 = inlined_call_operand.vmem [shape: f32[3,128,128], index: 4, kind: input, shape index: {}]
  %s5 = inlined_call_operand.vmem [shape: f32[1,128], index: 5, kind: input, shape index: {}]
  %s6 = inlined_call_operand.vmem [shape: f32[2,16,128], index: 6, kind: output, shape index: {}]
  %s7 = sld [smem:[#allocation0]]
  $region57: #{residualconv_forward.1} parent=0
    _
  %s9 = ssub.s32 1, %s7
  %s10 = scalar_select 0, %s9, %s7
  loop: start=0, step=1, limit=4
  $region2: #{residualconv_forward.1} parent=0 // loop_pre_header
    _
  $region3: #{residualconv_forward.1} parent=0 // loop_header
    %s12 = sphi 0, %s16
    %p13 = scmp.ge.s32.totalorder %s12, 4
    %s22 = sphi 0, %s24
    %s25 = sphi 0, %s22
    %s26 = sphi 0, %s25
    %s42 = sphi 0, %s26
    %s48 = sphi 0, %s50
    %s51 = sphi 0, %s48
    %s52 = sphi 0, %s51
    %s68 = sphi 0, %s52
    %s72 = sphi 0, %s72
    %s74 = sphi 0, %s72
    %s75 = sphi 0, %s74
    %s89 = sphi 0, %s75
    %s93 = sphi 0, %s93
    %s95 = sphi 0, %s93
    %s96 = sphi 0, %s95
    %s110 = sphi 0, %s96
    %s114 = sphi 0, %s114
    %s116 = sphi 0, %s114
    %s117 = sphi 0, %s116
    %s131 = sphi 0, %s117
    %s135 = sphi 0, %s135
    %s137 = sphi 0, %s135
    %s138 = sphi 0, %s137
    %s152 = sphi 0, %s138
    %s158 = sphi 0, %s160
    %s161 = sphi 0, %s158
    %s162 = sphi 0, %s161
    %s178 = sphi 0, %s162
  $region4: #{residualconv_forward.1} parent=0 // loop_header_branch
    %15 = sbr.rel (%p13) target = $region8
  $region5: #{residualconv_forward.1} parent=0 // loop_body
    %s17 = ssub.s32 %s12, 1
    %s18 = ssub.s32 %s12, 2
    %s19 = sadd.s32 %s12, 1
    %s20 = ssub.s32 %s12, %s19
    %p21 = scmp.eq.s32.totalorder %s20, 0
    %s23 = sadd.s32 %s22, 1
    %s24 = scalar_select %p21, %s22, %s23
    %p27 = pneg %p21
    %p28 = scmp.eq.s32.totalorder %s12, 1
    %p29 = por %p27, %p28
    %p30 = scmp.ne.s32.totalorder %s22, %s25
    %p31 = scmp.eq.s32.totalorder %s12, 0
    %p32 = por %p30, %p31
    %p33 = scmp.ne.s32.totalorder %s22, %s25
    %p34 = scmp.eq.s32.totalorder %s17, 1
    %p35 = por %p33, %p34
    %p36 = scmp.ne.s32.totalorder %s25, %s26
    %p37 = scmp.eq.s32.totalorder %s17, 0
    %p38 = por %p36, %p37
    %p39 = scmp.ne.s32.totalorder %s25, %s26
    %p40 = scmp.eq.s32.totalorder %s18, 1
    %p41 = por %p39, %p40
    %p43 = scmp.ne.s32.totalorder %s26, %s42
    %p44 = scmp.eq.s32.totalorder %s18, 0
    %p45 = por %p43, %p44
    %s46 = ssub.s32 %s12, %s19
    %p47 = scmp.eq.s32.totalorder %s46, 0
    %s49 = sadd.s32 %s48, 1
    %s50 = scalar_select %p47, %s48, %s49
    %p53 = pneg %p47
    %p54 = scmp.eq.s32.totalorder %s12, 1
    %p55 = por %p53, %p54
    %p56 = scmp.ne.s32.totalorder %s48, %s51
    %p57 = scmp.eq.s32.totalorder %s12, 0
    %p58 = por %p56, %p57
    %p59 = scmp.ne.s32.totalorder %s48, %s51
    %p60 = scmp.eq.s32.totalorder %s17, 1
    %p61 = por %p59, %p60
    %p62 = scmp.ne.s32.totalorder %s51, %s52
    %p63 = scmp.eq.s32.totalorder %s17, 0
    %p64 = por %p62, %p63
    %p65 = scmp.ne.s32.totalorder %s51, %s52
    %p66 = scmp.eq.s32.totalorder %s18, 1
    %p67 = por %p65, %p66
    %p69 = scmp.ne.s32.totalorder %s52, %s68
    %p70 = scmp.eq.s32.totalorder %s18, 0
    %p71 = por %p69, %p70
    %s73 = sadd.s32 %s72, 1
    %p76 = scmp.eq.s32.totalorder %s12, 1
    %p77 = scmp.ne.s32.totalorder %s72, %s74
    %p78 = scmp.eq.s32.totalorder %s12, 0
    %p79 = por %p77, %p78
    %p80 = scmp.ne.s32.totalorder %s72, %s74
    %p81 = scmp.eq.s32.totalorder %s17, 1
    %p82 = por %p80, %p81
    %p83 = scmp.ne.s32.totalorder %s74, %s75
    %p84 = scmp.eq.s32.totalorder %s17, 0
    %p85 = por %p83, %p84
    %p86 = scmp.ne.s32.totalorder %s74, %s75
    %p87 = scmp.eq.s32.totalorder %s18, 1
    %p88 = por %p86, %p87
    %p90 = scmp.ne.s32.totalorder %s75, %s89
    %p91 = scmp.eq.s32.totalorder %s18, 0
    %p92 = por %p90, %p91
    %s94 = sadd.s32 %s93, 1
    %p97 = scmp.eq.s32.totalorder %s12, 1
    %p98 = scmp.ne.s32.totalorder %s93, %s95
    %p99 = scmp.eq.s32.totalorder %s12, 0
    %p100 = por %p98, %p99
    %p101 = scmp.ne.s32.totalorder %s93, %s95
    %p102 = scmp.eq.s32.totalorder %s17, 1
    %p103 = por %p101, %p102
    %p104 = scmp.ne.s32.totalorder %s95, %s96
    %p105 = scmp.eq.s32.totalorder %s17, 0
    %p106 = por %p104, %p105
    %p107 = scmp.ne.s32.totalorder %s95, %s96
    %p108 = scmp.eq.s32.totalorder %s18, 1
    %p109 = por %p107, %p108
    %p111 = scmp.ne.s32.totalorder %s96, %s110
    %p112 = scmp.eq.s32.totalorder %s18, 0
    %p113 = por %p111, %p112
    %s115 = sadd.s32 %s114, 1
    %p118 = scmp.eq.s32.totalorder %s12, 1
    %p119 = scmp.ne.s32.totalorder %s114, %s116
    %p120 = scmp.eq.s32.totalorder %s12, 0
    %p121 = por %p119, %p120
    %p122 = scmp.ne.s32.totalorder %s114, %s116
    %p123 = scmp.eq.s32.totalorder %s17, 1
    %p124 = por %p122, %p123
    %p125 = scmp.ne.s32.totalorder %s116, %s117
    %p126 = scmp.eq.s32.totalorder %s17, 0
    %p127 = por %p125, %p126
    %p128 = scmp.ne.s32.totalorder %s116, %s117
    %p129 = scmp.eq.s32.totalorder %s18, 1
    %p130 = por %p128, %p129
    %p132 = scmp.ne.s32.totalorder %s117, %s131
    %p133 = scmp.eq.s32.totalorder %s18, 0
    %p134 = por %p132, %p133
    %s136 = sadd.s32 %s135, 1
    %p139 = scmp.eq.s32.totalorder %s12, 1
    %p140 = scmp.ne.s32.totalorder %s135, %s137
    %p141 = scmp.eq.s32.totalorder %s12, 0
    %p142 = por %p140, %p141
    %p143 = scmp.ne.s32.totalorder %s135, %s137
    %p144 = scmp.eq.s32.totalorder %s17, 1
    %p145 = por %p143, %p144
    %p146 = scmp.ne.s32.totalorder %s137, %s138
    %p147 = scmp.eq.s32.totalorder %s17, 0
    %p148 = por %p146, %p147
    %p149 = scmp.ne.s32.totalorder %s137, %s138
    %p150 = scmp.eq.s32.totalorder %s18, 1
    %p151 = por %p149, %p150
    %p153 = scmp.ne.s32.totalorder %s138, %s152
    %p154 = scmp.eq.s32.totalorder %s18, 0
    %p155 = por %p153, %p154
    %s156 = ssub.s32 %s12, %s19
    %p157 = scmp.eq.s32.totalorder %s156, 0
    %s159 = sadd.s32 %s158, 1
    %s160 = scalar_select %p157, %s158, %s159
    %p163 = pneg %p157
    %p164 = scmp.eq.s32.totalorder %s12, 1
    %p165 = por %p163, %p164
    %p166 = scmp.ne.s32.totalorder %s158, %s161
    %p167 = scmp.eq.s32.totalorder %s12, 0
    %p168 = por %p166, %p167
    %p169 = scmp.ne.s32.totalorder %s158, %s161
    %p170 = scmp.eq.s32.totalorder %s17, 1
    %p171 = por %p169, %p170
    %p172 = scmp.ne.s32.totalorder %s161, %s162
    %p173 = scmp.eq.s32.totalorder %s17, 0
    %p174 = por %p172, %p173
    %p175 = scmp.ne.s32.totalorder %s161, %s162
    %p176 = scmp.eq.s32.totalorder %s18, 1
    %p177 = por %p175, %p176
    %p179 = scmp.ne.s32.totalorder %s162, %s178
    %p180 = scmp.eq.s32.totalorder %s18, 0
    %p181 = por %p179, %p180
    %p182 = scmp.le.s32.totalorder 1, %s12
    %p183 = scmp.lt.s32.totalorder %s12, 3
    %p184 = pnand %p182, %p183
    %p185 = pneg %p184
    // Predicated region
    $region9: #{residualconv_forward.1} parent=5 // pred_check
      _
    $region10: #{residualconv_forward.1} parent=5 // pred_check_branch
      %187 = sbr.rel (%p184) target = $region12
    $region11: #{residualconv_forward.1} parent=5 // pred_region
      %s188 = ssub.s32 %s12, 1
      // Predicated region
      $region13: #{residualconv_forward.1} parent=11 // pred_check
        %p189 = pneg %p85
      $region14: #{residualconv_forward.1} parent=11 // pred_check_branch
        %191 = sbr.rel (%p189) target = $region16
      $region15: #{residualconv_forward.1} parent=11 // pred_region
        _
      $region16: #{residualconv_forward.1} parent=11 // pred_fallthru
        _
      // Predicated region
      $region17: #{residualconv_forward.1} parent=11 // pred_check
        %p192 = pneg %p106
      $region18: #{residualconv_forward.1} parent=11 // pred_check_branch
        %194 = sbr.rel (%p192) target = $region20
      $region19: #{residualconv_forward.1} parent=11 // pred_region
        _
      $region20: #{residualconv_forward.1} parent=11 // pred_fallthru
        _
      // Predicated region
      $region21: #{residualconv_forward.1} parent=11 // pred_check
        %p195 = pneg %p127
      $region22: #{residualconv_forward.1} parent=11 // pred_check_branch
        %197 = sbr.rel (%p195) target = $region24
      $region23: #{residualconv_forward.1} parent=11 // pred_region
        _
      $region24: #{residualconv_forward.1} parent=11 // pred_fallthru
        _
      // Predicated region
      $region25: #{residualconv_forward.1} parent=11 // pred_check
        %p198 = pneg %p148
      $region26: #{residualconv_forward.1} parent=11 // pred_check_branch
        %200 = sbr.rel (%p198) target = $region28
      $region27: #{residualconv_forward.1} parent=11 // pred_region
        _
      $region28: #{residualconv_forward.1} parent=11 // pred_fallthru
        _
    $region12: #{residualconv_forward.1} parent=5 // pred_fallthru
      _
    %p201 = scmp.lt.s32.totalorder %s12, 2
    // Predicated region
    $region29: #{residualconv_forward.1} parent=5 // pred_check
      %p202 = pneg %p201
    $region30: #{residualconv_forward.1} parent=5 // pred_check_branch
      %204 = sbr.rel (%p202) target = $region32
    $region31: #{residualconv_forward.1} parent=5 // pred_region
      // Predicated region
      $region33: #{residualconv_forward.1} parent=31 // pred_check
        %p205 = pneg %p32
      $region34: #{residualconv_forward.1} parent=31 // pred_check_branch
        %207 = sbr.rel (%p205) target = $region36
      $region35: #{residualconv_forward.1} parent=31 // pred_region
        %p208 = scmp.lt.s32.totalorder %s12, 1
        %s209 = scalar_select %p208, %s12, 1
        %s210 = smul.addr %s209, 2
        %s211 = smul.addr %s210, 8
        %s212 = scalar_lea.vmem %s0, %s211
      $region36: #{residualconv_forward.1} parent=31 // pred_fallthru
        _
      // Predicated region
      $region37: #{residualconv_forward.1} parent=31 // pred_check
        %p213 = pneg %p58
      $region38: #{residualconv_forward.1} parent=31 // pred_check_branch
        %215 = sbr.rel (%p213) target = $region40
      $region39: #{residualconv_forward.1} parent=31 // pred_region
        %p216 = scmp.lt.s32.totalorder %s12, 1
        %s217 = scalar_select %p216, %s12, 1
        %s218 = smul.addr %s217, 2
        %s219 = smul.addr %s218, 8
        %s220 = scalar_lea.vmem %s1, %s219
      $region40: #{residualconv_forward.1} parent=31 // pred_fallthru
        _
    $region32: #{residualconv_forward.1} parent=5 // pred_fallthru
      _
    %p221 = scmp.le.s32.totalorder 1, %s12
    %p222 = scmp.lt.s32.totalorder %s12, 3
    %p223 = pnand %p221, %p222
    %p224 = pneg %p223
    // Predicated region
    $region41: #{residualconv_forward.1} parent=5 // pred_check
      _
    $region42: #{residualconv_forward.1} parent=5 // pred_check_branch
      %226 = sbr.rel (%p223) target = $region44
    $region43: #{residualconv_forward.1} parent=5 // pred_region
      %s227 = ssub.s32 %s12, 1
      %p228 = scmp.lt.s32.totalorder %s17, 1
      %s229 = scalar_select %p228, %s17, 1
      %s230 = smul.addr %s229, 2
      %s231 = smul.addr %s230, 8
      %s232 = scalar_lea.vmem %s0, %s231
      %p233 = pneg %p38
      %p234 = pneg %p35
      %p235 = scmp.lt.s32.totalorder %s17, 1
      %s236 = scalar_select %p235, %s17, 1
      %s237 = smul.addr %s236, 2
      %s238 = smul.addr %s237, 8
      %s239 = scalar_lea.vmem %s1, %s238
      %p240 = pneg %p64
      %p241 = pneg %p61
      %p242 = pneg %p85
      %p243 = pneg %p82
      %p244 = pneg %p106
      %p245 = pneg %p103
      %p246 = pneg %p127
      %p247 = pneg %p124
      %p248 = pneg %p148
      %p249 = pneg %p145
      %p250 = pneg %p174
      %p251 = pneg %p171
      %p252 = scmp.lt.s32.totalorder %s17, 1
      %s253 = scalar_select %p252, %s17, 1
      %s254 = smul.addr %s253, 2
      %s255 = smul.addr %s254, 8
      %s256 = scalar_lea.vmem %s6, %s255
      %p257 = scmp.lt.s32.totalorder %s17, 1
      %s258 = scalar_select %p257, %s17, 1
      %s259 = smul.addr %s258, 2
      %s260 = smul.addr %s259, 8
      %s261 = scalar_lea.vmem %s0, %s260
      %p262 = scmp.lt.s32.totalorder %s17, 1
      %s263 = scalar_select %p262, %s17, 1
      %s264 = smul.addr %s263, 2
      %s265 = smul.addr %s264, 8
      %s266 = scalar_lea.vmem %s1, %s265
      %p267 = scmp.lt.s32.totalorder %s17, 1
      %s268 = scalar_select %p267, %s17, 1
      %s269 = smul.addr %s268, 2
      %s270 = smul.addr %s269, 8
      %s271 = scalar_lea.vmem %s6, %s270
      %v272 = vld [vmem:[%s261] sm:$0xff]
      %v273 = vld [vmem:[%s261 + $0x8] sm:$0xff]
      %v274 = vlaneseq
      %v275 = vshrl.u32 %v274, 7
      %v276 = vadd.s32 %v275, 8
      %v277 = vlaneseq
      %v278 = vand.u32 %v277, 127
      %vm279 = vcmp.eq.s32.totalorder %v275, %v278
      %vm280 = vcmp.eq.s32.totalorder %v276, %v278
      %v281 = vsel %vm279, 1, 0
      %v282 = vsel %vm280, 1, 0
      %v283 = vcvt.s32.f32 %v281
      %v284 = vcvt.s32.f32 %v282
      %v285 = vadd.f32 %v272, %v283
      %v286 = vadd.f32 %v273, %v284
      %vm287 = vcmask 130048
      %v288 = vsel %vm287, %v285, 0.0
      %v289 = vsel %vm287, %v286, 0.0
      %v290 = vadd.f32 %v288, %v289
      %v291 = vrot.slane %v290, 4
      %v292 = vadd.f32 %v290, %v291
      %v293 = vrot.slane %v292, 2
      %v294 = vadd.f32 %v292, %v293
      %v295 = vrot.slane %v294, 1
      %v296 = vadd.f32 %v294, %v295
      %v297 = vrcp.pop %v296
      %v298 = vmul.f32 %v285, %v297
      %v299 = vmul.f32 %v286, %v297
      %v300 = vld [vmem:[%s266] sm:$0xff]
      %v301 = vld [vmem:[%s266 + $0x8] sm:$0xff]
      %v302 = vld [vmem:[%s2] sm:$0xff]
      %v303 = vld [vmem:[%s2 + $0x8] sm:$0xff]
      %v304 = vld [vmem:[%s2 + $0x10] sm:$0xff]
      %v305 = vld [vmem:[%s2 + $0x18] sm:$0xff]
      %v306 = vld [vmem:[%s2 + $0x20] sm:$0xff]
      %v307 = vld [vmem:[%s2 + $0x28] sm:$0xff]
      %v308 = vld [vmem:[%s2 + $0x30] sm:$0xff]
      %v309 = vld [vmem:[%s2 + $0x38] sm:$0xff]
      %v310 = vld [vmem:[%s2 + $0x40] sm:$0xff]
      %v311 = vld [vmem:[%s2 + $0x48] sm:$0xff]
      %v312 = vld [vmem:[%s2 + $0x50] sm:$0xff]
      %v313 = vld [vmem:[%s2 + $0x58] sm:$0xff]
      %v314 = vld [vmem:[%s2 + $0x60] sm:$0xff]
      %v315 = vld [vmem:[%s2 + $0x68] sm:$0xff]
      %v316 = vld [vmem:[%s2 + $0x70] sm:$0xff]
      %v317 = vld [vmem:[%s2 + $0x78] sm:$0xff]
      %v318 = vld [vmem:[%s3] sm:$0x1]
      %v319 = vld [vmem:[%s4] sm:$0xff]
      %v320 = vld [vmem:[%s4 + $0x8] sm:$0xff]
      %v321 = vld [vmem:[%s4 + $0x10] sm:$0xff]
      %v322 = vld [vmem:[%s4 + $0x18] sm:$0xff]
      %v323 = vld [vmem:[%s4 + $0x20] sm:$0xff]
      %v324 = vld [vmem:[%s4 + $0x28] sm:$0xff]
      %v325 = vld [vmem:[%s4 + $0x30] sm:$0xff]
      %v326 = vld [vmem:[%s4 + $0x38] sm:$0xff]
      %v327 = vld [vmem:[%s4 + $0x40] sm:$0xff]
      %v328 = vld [vmem:[%s4 + $0x48] sm:$0xff]
      %v329 = vld [vmem:[%s4 + $0x50] sm:$0xff]
      %v330 = vld [vmem:[%s4 + $0x58] sm:$0xff]
      %v331 = vld [vmem:[%s4 + $0x60] sm:$0xff]
      %v332 = vld [vmem:[%s4 + $0x68] sm:$0xff]
      %v333 = vld [vmem:[%s4 + $0x70] sm:$0xff]
      %v334 = vld [vmem:[%s4 + $0x78] sm:$0xff]
      %v336 = vlaneseq
      %v337 = vshrl.u32 %v336, 7
      %v338 = vsub.s32 0, %v337
      %v339 = vrot.slane %v318, %v338
      %341 = vmatprep.subr.mxu0 0.0
      %342 = vmatpush1.msra.mxu0 %v317
      %343 = vmatprep.subr.mxu0 0.0
      %344 = vmatpush1.msra.mxu0 %v316
      %345 = vmatprep.subr.mxu0 0.0
      %346 = vmatpush1.msra.mxu0 %v315
      %347 = vmatprep.subr.mxu0 0.0
      %348 = vmatpush1.msra.mxu0 %v314
      %349 = vmatprep.subr.mxu0 0.0
      %350 = vmatpush1.msra.mxu0 %v313
      %351 = vmatprep.subr.mxu0 0.0
      %352 = vmatpush1.msra.mxu0 %v312
      %353 = vmatprep.subr.mxu0 0.0
      %354 = vmatpush1.msra.mxu0 %v311
      %355 = vmatprep.subr.mxu0 0.0
      %356 = vmatpush1.msra.mxu0 %v310
      %357 = vmatprep.subr.mxu0 0.0
      %358 = vmatpush1.msra.mxu0 %v309
      %359 = vmatprep.subr.mxu0 0.0
      %360 = vmatpush1.msra.mxu0 %v308
      %361 = vmatprep.subr.mxu0 0.0
      %362 = vmatpush1.msra.mxu0 %v307
      %363 = vmatprep.subr.mxu0 0.0
      %364 = vmatpush1.msra.mxu0 %v306
      %365 = vmatprep.subr.mxu0 0.0
      %366 = vmatpush1.msra.mxu0 %v305
      %367 = vmatprep.subr.mxu0 0.0
      %368 = vmatpush1.msra.mxu0 %v304
      %369 = vmatprep.subr.mxu0 0.0
      %370 = vmatpush1.msra.mxu0 %v303
      %371 = vmatprep.subr.mxu0 0.0
      %372 = vmatpush1.msra.mxu0 %v302
      %373 = vmatprep.subr.mxu0 0.0
      %374 = vmatpush2.msra.mxu0 0.0
      %375 = vmatprep.subr.mxu0 0.0
      %376 = vmatpush2.msra.mxu0 0.0
      %377 = vmatprep.subr.mxu0 0.0
      %378 = vmatpush2.msra.mxu0 0.0
      %379 = vmatprep.subr.mxu0 0.0
      %380 = vmatpush2.msra.mxu0 0.0
      %381 = vmatprep.subr.mxu0 0.0
      %382 = vmatpush2.msra.mxu0 0.0
      %383 = vmatprep.subr.mxu0 0.0
      %384 = vmatpush2.msra.mxu0 0.0
      %385 = vmatprep.subr.mxu0 0.0
      %386 = vmatpush2.msra.mxu0 0.0
      %387 = vmatprep.subr.mxu0 0.0
      %388 = vmatpush2.msra.mxu0 0.0
      %389 = vmatprep.subr.mxu0 0.0
      %390 = vmatpush2.msra.mxu0 0.0
      %391 = vmatprep.subr.mxu0 0.0
      %392 = vmatpush2.msra.mxu0 0.0
      %393 = vmatprep.subr.mxu0 0.0
      %394 = vmatpush2.msra.mxu0 0.0
      %395 = vmatprep.subr.mxu0 0.0
      %396 = vmatpush2.msra.mxu0 0.0
      %397 = vmatprep.subr.mxu0 0.0
      %398 = vmatpush2.msra.mxu0 0.0
      %399 = vmatprep.subr.mxu0 0.0
      %400 = vmatpush2.msra.mxu0 0.0
      %401 = vmatprep.subr.mxu0 0.0
      %402 = vmatpush2.msra.mxu0 0.0
      %403 = vmatprep.subr.mxu0 0.0
      %404 = vmatpush2.msra.mxu0 0.0
      %405 = vmatprep.mubr.f32.mxu0 0.0
      %406 = vmatmul.mubr.f32.gmra.mxu0 %v300
      %v407 = vpop.f32.mrf.mxu0
      %v408 = vadd.f32 %v339, %v407
      %v409 = vpop.f32.mrf.mxu0
      %410 = vmatprep.mubr.f32.mxu0 0.0
      %411 = vmatmul.mubr.f32.gmra.mxu0 %v301
      %v412 = vpop.f32.mrf.mxu0
      %v413 = vadd.f32 %v339, %v412
      %v414 = vpop.f32.mrf.mxu0
      %415 = vdwg.mxu0
      %v417 = vsel %vm287, %v298, 0
      %v420 = vsel %vm287, %v299, 0
      %422 = vmatprep.subr.mxu0 0.0
      %423 = vmatpush1.msra.mxu0 0.0
      %424 = vmatprep.subr.mxu0 0.0
      %425 = vmatpush1.msra.mxu0 0.0
      %426 = vmatprep.subr.mxu0 0.0
      %427 = vmatpush1.msra.mxu0 0.0
      %428 = vmatprep.subr.mxu0 0.0
      %429 = vmatpush1.msra.mxu0 0.0
      %430 = vmatprep.subr.mxu0 0.0
      %431 = vmatpush1.msra.mxu0 0.0
      %432 = vmatprep.subr.mxu0 0.0
      %433 = vmatpush1.msra.mxu0 0.0
      %434 = vmatprep.subr.mxu0 0.0
      %435 = vmatpush1.msra.mxu0 0.0
      %436 = vmatprep.subr.mxu0 0.0
      %437 = vmatpush1.msra.mxu0 0.0
      %438 = vmatprep.subr.mxu0 0.0
      %439 = vmatpush1.msra.mxu0 0.0
      %440 = vmatprep.subr.mxu0 0.0
      %441 = vmatpush1.msra.mxu0 0.0
      %442 = vmatprep.subr.mxu0 0.0
      %443 = vmatpush1.msra.mxu0 0.0
      %444 = vmatprep.subr.mxu0 0.0
      %445 = vmatpush1.msra.mxu0 0.0
      %446 = vmatprep.subr.mxu0 0.0
      %447 = vmatpush1.msra.mxu0 0.0
      %448 = vmatprep.subr.mxu0 0.0
      %449 = vmatpush1.msra.mxu0 0.0
      %450 = vmatprep.subr.mxu0 0.0
      %451 = vmatpush1.msra.mxu0 %v413
      %452 = vmatprep.subr.mxu0 0.0
      %453 = vmatpush1.msra.mxu0 %v408
      %454 = vmatprep.subr.mxu0 0.0
      %455 = vmatpush2.msra.mxu0 0.0
      %456 = vmatprep.subr.mxu0 0.0
      %457 = vmatpush2.msra.mxu0 0.0
      %458 = vmatprep.subr.mxu0 0.0
      %459 = vmatpush2.msra.mxu0 0.0
      %460 = vmatprep.subr.mxu0 0.0
      %461 = vmatpush2.msra.mxu0 0.0
      %462 = vmatprep.subr.mxu0 0.0
      %463 = vmatpush2.msra.mxu0 0.0
      %464 = vmatprep.subr.mxu0 0.0
      %465 = vmatpush2.msra.mxu0 0.0
      %466 = vmatprep.subr.mxu0 0.0
      %467 = vmatpush2.msra.mxu0 0.0
      %468 = vmatprep.subr.mxu0 0.0
      %469 = vmatpush2.msra.mxu0 0.0
      %470 = vmatprep.subr.mxu0 0.0
      %471 = vmatpush2.msra.mxu0 0.0
      %472 = vmatprep.subr.mxu0 0.0
      %473 = vmatpush2.msra.mxu0 0.0
      %474 = vmatprep.subr.mxu0 0.0
      %475 = vmatpush2.msra.mxu0 0.0
      %476 = vmatprep.subr.mxu0 0.0
      %477 = vmatpush2.msra.mxu0 0.0
      %478 = vmatprep.subr.mxu0 0.0
      %479 = vmatpush2.msra.mxu0 0.0
      %480 = vmatprep.subr.mxu0 0.0
      %481 = vmatpush2.msra.mxu0 0.0
      %482 = vmatprep.subr.mxu0 0.0
      %483 = vmatpush2.msra.mxu0 0.0
      %484 = vmatprep.subr.mxu0 0.0
      %485 = vmatpush2.msra.mxu0 0.0
      %486 = vmatprep.mubr.f32.mxu0 0.0
      %487 = vmatmul.mubr.f32.gmra.mxu0 %v417
      %v488 = vpop.f32.mrf.mxu0
      %v489 = vadd.f32 0.0, %v488
      %v490 = vpop.f32.mrf.mxu0
      %491 = vmatprep.mubr.f32.mxu0 0.0
      %492 = vmatmul.mubr.f32.gmra.mxu0 %v420
      %v493 = vpop.f32.mrf.mxu0
      %v494 = vadd.f32 0.0, %v493
      %v495 = vpop.f32.mrf.mxu0
      %496 = vdwg.mxu0
      %v497 = vmul.f32 %v300, 0.05
      %v498 = vmul.f32 %v301, 0.05
      %v499 = vmul.f32 %v489, 0.95
      %v500 = vmul.f32 %v494, 0.95
      %v501 = vadd.f32 %v497, %v499
      %v502 = vadd.f32 %v498, %v500
      %s503 = scalar_lea.vmem %s4, 128
      %v504 = vld [vmem:[%s503] sm:$0xff]
      %v505 = vld [vmem:[%s503 + $0x8] sm:$0xff]
      %v506 = vld [vmem:[%s503 + $0x10] sm:$0xff]
      %v507 = vld [vmem:[%s503 + $0x18] sm:$0xff]
      %v508 = vld [vmem:[%s503 + $0x20] sm:$0xff]
      %v509 = vld [vmem:[%s503 + $0x28] sm:$0xff]
      %v510 = vld [vmem:[%s503 + $0x30] sm:$0xff]
      %v511 = vld [vmem:[%s503 + $0x38] sm:$0xff]
      %v512 = vld [vmem:[%s503 + $0x40] sm:$0xff]
      %v513 = vld [vmem:[%s503 + $0x48] sm:$0xff]
      %v514 = vld [vmem:[%s503 + $0x50] sm:$0xff]
      %v515 = vld [vmem:[%s503 + $0x58] sm:$0xff]
      %v516 = vld [vmem:[%s503 + $0x60] sm:$0xff]
      %v517 = vld [vmem:[%s503 + $0x68] sm:$0xff]
      %v518 = vld [vmem:[%s503 + $0x70] sm:$0xff]
      %v519 = vld [vmem:[%s503 + $0x78] sm:$0xff]
      %520 = vmatprep.subr.mxu0 0.0
      %521 = vmatpush1.msra.mxu0 %v519
      %522 = vmatprep.subr.mxu0 0.0
      %523 = vmatpush1.msra.mxu0 %v518
      %524 = vmatprep.subr.mxu0 0.0
      %525 = vmatpush1.msra.mxu0 %v517
      %526 = vmatprep.subr.mxu0 0.0
      %527 = vmatpush1.msra.mxu0 %v516
      %528 = vmatprep.subr.mxu0 0.0
      %529 = vmatpush1.msra.mxu0 %v515
      %530 = vmatprep.subr.mxu0 0.0
      %531 = vmatpush1.msra.mxu0 %v514
      %532 = vmatprep.subr.mxu0 0.0
      %533 = vmatpush1.msra.mxu0 %v513
      %534 = vmatprep.subr.mxu0 0.0
      %535 = vmatpush1.msra.mxu0 %v512
      %536 = vmatprep.subr.mxu0 0.0
      %537 = vmatpush1.msra.mxu0 %v511
      %538 = vmatprep.subr.mxu0 0.0
      %539 = vmatpush1.msra.mxu0 %v510
      %540 = vmatprep.subr.mxu0 0.0
      %541 = vmatpush1.msra.mxu0 %v509
      %542 = vmatprep.subr.mxu0 0.0
      %543 = vmatpush1.msra.mxu0 %v508
      %544 = vmatprep.subr.mxu0 0.0
      %545 = vmatpush1.msra.mxu0 %v507
      %546 = vmatprep.subr.mxu0 0.0
      %547 = vmatpush1.msra.mxu0 %v506
      %548 = vmatprep.subr.mxu0 0.0
      %549 = vmatpush1.msra.mxu0 %v505
      %550 = vmatprep.subr.mxu0 0.0
      %551 = vmatpush1.msra.mxu0 %v504
      %552 = vmatprep.subr.mxu0 0.0
      %553 = vmatpush2.msra.mxu0 0.0
      %554 = vmatprep.subr.mxu0 0.0
      %555 = vmatpush2.msra.mxu0 0.0
      %556 = vmatprep.subr.mxu0 0.0
      %557 = vmatpush2.msra.mxu0 0.0
      %558 = vmatprep.subr.mxu0 0.0
      %559 = vmatpush2.msra.mxu0 0.0
      %560 = vmatprep.subr.mxu0 0.0
      %561 = vmatpush2.msra.mxu0 0.0
      %562 = vmatprep.subr.mxu0 0.0
      %563 = vmatpush2.msra.mxu0 0.0
      %564 = vmatprep.subr.mxu0 0.0
      %565 = vmatpush2.msra.mxu0 0.0
      %566 = vmatprep.subr.mxu0 0.0
      %567 = vmatpush2.msra.mxu0 0.0
      %568 = vmatprep.subr.mxu0 0.0
      %569 = vmatpush2.msra.mxu0 0.0
      %570 = vmatprep.subr.mxu0 0.0
      %571 = vmatpush2.msra.mxu0 0.0
      %572 = vmatprep.subr.mxu0 0.0
      %573 = vmatpush2.msra.mxu0 0.0
      %574 = vmatprep.subr.mxu0 0.0
      %575 = vmatpush2.msra.mxu0 0.0
      %576 = vmatprep.subr.mxu0 0.0
      %577 = vmatpush2.msra.mxu0 0.0
      %578 = vmatprep.subr.mxu0 0.0
      %579 = vmatpush2.msra.mxu0 0.0
      %580 = vmatprep.subr.mxu0 0.0
      %581 = vmatpush2.msra.mxu0 0.0
      %582 = vmatprep.subr.mxu0 0.0
      %583 = vmatpush2.msra.mxu0 0.0
      %584 = vmatprep.mubr.f32.mxu0 0.0
      %585 = vmatmul.mubr.f32.gmra.mxu0 %v501
      %v586 = vpop.f32.mrf.mxu0
      %v587 = vadd.f32 0.0, %v586
      %v588 = vpop.f32.mrf.mxu0
      %589 = vmatprep.mubr.f32.mxu0 0.0
      %590 = vmatmul.mubr.f32.gmra.mxu0 %v502
      %v591 = vpop.f32.mrf.mxu0
      %v592 = vadd.f32 0.0, %v591
      %v593 = vpop.f32.mrf.mxu0
      %594 = vdwg.mxu0
      %595 = vmatprep.subr.mxu0 0.0
      %596 = vmatpush1.msra.mxu0 %v334
      %597 = vmatprep.subr.mxu0 0.0
      %598 = vmatpush1.msra.mxu0 %v333
      %599 = vmatprep.subr.mxu0 0.0
      %600 = vmatpush1.msra.mxu0 %v332
      %601 = vmatprep.subr.mxu0 0.0
      %602 = vmatpush1.msra.mxu0 %v331
      %603 = vmatprep.subr.mxu0 0.0
      %604 = vmatpush1.msra.mxu0 %v330
      %605 = vmatprep.subr.mxu0 0.0
      %606 = vmatpush1.msra.mxu0 %v329
      %607 = vmatprep.subr.mxu0 0.0
      %608 = vmatpush1.msra.mxu0 %v328
      %609 = vmatprep.subr.mxu0 0.0
      %610 = vmatpush1.msra.mxu0 %v327
      %611 = vmatprep.subr.mxu0 0.0
      %612 = vmatpush1.msra.mxu0 %v326
      %613 = vmatprep.subr.mxu0 0.0
      %614 = vmatpush1.msra.mxu0 %v325
      %615 = vmatprep.subr.mxu0 0.0
      %616 = vmatpush1.msra.mxu0 %v324
      %617 = vmatprep.subr.mxu0 0.0
      %618 = vmatpush1.msra.mxu0 %v323
      %619 = vmatprep.subr.mxu0 0.0
      %620 = vmatpush1.msra.mxu0 %v322
      %621 = vmatprep.subr.mxu0 0.0
      %622 = vmatpush1.msra.mxu0 %v321
      %623 = vmatprep.subr.mxu0 0.0
      %624 = vmatpush1.msra.mxu0 %v320
      %625 = vmatprep.subr.mxu0 0.0
      %626 = vmatpush1.msra.mxu0 %v319
      %627 = vmatprep.subr.mxu0 0.0
      %628 = vmatpush2.msra.mxu0 0.0
      %629 = vmatprep.subr.mxu0 0.0
      %630 = vmatpush2.msra.mxu0 0.0
      %631 = vmatprep.subr.mxu0 0.0
      %632 = vmatpush2.msra.mxu0 0.0
      %633 = vmatprep.subr.mxu0 0.0
      %634 = vmatpush2.msra.mxu0 0.0
      %635 = vmatprep.subr.mxu0 0.0
      %636 = vmatpush2.msra.mxu0 0.0
      %637 = vmatprep.subr.mxu0 0.0
      %638 = vmatpush2.msra.mxu0 0.0
      %639 = vmatprep.subr.mxu0 0.0
      %640 = vmatpush2.msra.mxu0 0.0
      %641 = vmatprep.subr.mxu0 0.0
      %642 = vmatpush2.msra.mxu0 0.0
      %643 = vmatprep.subr.mxu0 0.0
      %644 = vmatpush2.msra.mxu0 0.0
      %645 = vmatprep.subr.mxu0 0.0
      %646 = vmatpush2.msra.mxu0 0.0
      %647 = vmatprep.subr.mxu0 0.0
      %648 = vmatpush2.msra.mxu0 0.0
      %649 = vmatprep.subr.mxu0 0.0
      %650 = vmatpush2.msra.mxu0 0.0
      %651 = vmatprep.subr.mxu0 0.0
      %652 = vmatpush2.msra.mxu0 0.0
      %653 = vmatprep.subr.mxu0 0.0
      %654 = vmatpush2.msra.mxu0 0.0
      %655 = vmatprep.subr.mxu0 0.0
      %656 = vmatpush2.msra.mxu0 0.0
      %657 = vmatprep.subr.mxu0 0.0
      %658 = vmatpush2.msra.mxu0 0.0
      %659 = vmatprep.mubr.f32.mxu0 0.0
      %660 = vmatmul.mubr.f32.gmra.mxu0 %v300
      %v661 = vpop.f32.mrf.mxu0
      %v662 = vadd.f32 %v587, %v661
      %v663 = vpop.f32.mrf.mxu0
      %664 = vmatprep.mubr.f32.mxu0 0.0
      %665 = vmatmul.mubr.f32.gmra.mxu0 %v301
      %v666 = vpop.f32.mrf.mxu0
      %v667 = vadd.f32 %v592, %v666
      %v668 = vpop.f32.mrf.mxu0
      %669 = vdwg.mxu0
      %670 = vmatprep.subr.mxu0 0.0
      %671 = vmatpush1.msra.mxu0 %v317
      %672 = vmatprep.subr.mxu0 0.0
      %673 = vmatpush1.msra.mxu0 %v316
      %674 = vmatprep.subr.mxu0 0.0
      %675 = vmatpush1.msra.mxu0 %v315
      %676 = vmatprep.subr.mxu0 0.0
      %677 = vmatpush1.msra.mxu0 %v314
      %678 = vmatprep.subr.mxu0 0.0
      %679 = vmatpush1.msra.mxu0 %v313
      %680 = vmatprep.subr.mxu0 0.0
      %681 = vmatpush1.msra.mxu0 %v312
      %682 = vmatprep.subr.mxu0 0.0
      %683 = vmatpush1.msra.mxu0 %v311
      %684 = vmatprep.subr.mxu0 0.0
      %685 = vmatpush1.msra.mxu0 %v310
      %686 = vmatprep.subr.mxu0 0.0
      %687 = vmatpush1.msra.mxu0 %v309
      %688 = vmatprep.subr.mxu0 0.0
      %689 = vmatpush1.msra.mxu0 %v308
      %690 = vmatprep.subr.mxu0 0.0
      %691 = vmatpush1.msra.mxu0 %v307
      %692 = vmatprep.subr.mxu0 0.0
      %693 = vmatpush1.msra.mxu0 %v306
      %694 = vmatprep.subr.mxu0 0.0
      %695 = vmatpush1.msra.mxu0 %v305
      %696 = vmatprep.subr.mxu0 0.0
      %697 = vmatpush1.msra.mxu0 %v304
      %698 = vmatprep.subr.mxu0 0.0
      %699 = vmatpush1.msra.mxu0 %v303
      %700 = vmatprep.subr.mxu0 0.0
      %701 = vmatpush1.msra.mxu0 %v302
      %702 = vmatprep.subr.mxu0 0.0
      %703 = vmatpush2.msra.mxu0 0.0
      %704 = vmatprep.subr.mxu0 0.0
      %705 = vmatpush2.msra.mxu0 0.0
      %706 = vmatprep.subr.mxu0 0.0
      %707 = vmatpush2.msra.mxu0 0.0
      %708 = vmatprep.subr.mxu0 0.0
      %709 = vmatpush2.msra.mxu0 0.0
      %710 = vmatprep.subr.mxu0 0.0
      %711 = vmatpush2.msra.mxu0 0.0
      %712 = vmatprep.subr.mxu0 0.0
      %713 = vmatpush2.msra.mxu0 0.0
      %714 = vmatprep.subr.mxu0 0.0
      %715 = vmatpush2.msra.mxu0 0.0
      %716 = vmatprep.subr.mxu0 0.0
      %717 = vmatpush2.msra.mxu0 0.0
      %718 = vmatprep.subr.mxu0 0.0
      %719 = vmatpush2.msra.mxu0 0.0
      %720 = vmatprep.subr.mxu0 0.0
      %721 = vmatpush2.msra.mxu0 0.0
      %722 = vmatprep.subr.mxu0 0.0
      %723 = vmatpush2.msra.mxu0 0.0
      %724 = vmatprep.subr.mxu0 0.0
      %725 = vmatpush2.msra.mxu0 0.0
      %726 = vmatprep.subr.mxu0 0.0
      %727 = vmatpush2.msra.mxu0 0.0
      %728 = vmatprep.subr.mxu0 0.0
      %729 = vmatpush2.msra.mxu0 0.0
      %730 = vmatprep.subr.mxu0 0.0
      %731 = vmatpush2.msra.mxu0 0.0
      %732 = vmatprep.subr.mxu0 0.0
      %733 = vmatpush2.msra.mxu0 0.0
      %734 = vmatprep.mubr.f32.mxu0 0.0
      %735 = vmatmul.mubr.f32.gmra.mxu0 %v501
      %v736 = vpop.f32.mrf.mxu0
      %v737 = vadd.f32 %v339, %v736
      %v738 = vpop.f32.mrf.mxu0
      %739 = vmatprep.mubr.f32.mxu0 0.0
      %740 = vmatmul.mubr.f32.gmra.mxu0 %v502
      %v741 = vpop.f32.mrf.mxu0
      %v742 = vadd.f32 %v339, %v741
      %v743 = vpop.f32.mrf.mxu0
      %744 = vdwg.mxu0
      %745 = vmatprep.subr.mxu0 0.0
      %746 = vmatpush1.msra.mxu0 0.0
      %747 = vmatprep.subr.mxu0 0.0
      %748 = vmatpush1.msra.mxu0 0.0
      %749 = vmatprep.subr.mxu0 0.0
      %750 = vmatpush1.msra.mxu0 0.0
      %751 = vmatprep.subr.mxu0 0.0
      %752 = vmatpush1.msra.mxu0 0.0
      %753 = vmatprep.subr.mxu0 0.0
      %754 = vmatpush1.msra.mxu0 0.0
      %755 = vmatprep.subr.mxu0 0.0
      %756 = vmatpush1.msra.mxu0 0.0
      %757 = vmatprep.subr.mxu0 0.0
      %758 = vmatpush1.msra.mxu0 0.0
      %759 = vmatprep.subr.mxu0 0.0
      %760 = vmatpush1.msra.mxu0 0.0
      %761 = vmatprep.subr.mxu0 0.0
      %762 = vmatpush1.msra.mxu0 0.0
      %763 = vmatprep.subr.mxu0 0.0
      %764 = vmatpush1.msra.mxu0 0.0
      %765 = vmatprep.subr.mxu0 0.0
      %766 = vmatpush1.msra.mxu0 0.0
      %767 = vmatprep.subr.mxu0 0.0
      %768 = vmatpush1.msra.mxu0 0.0
      %769 = vmatprep.subr.mxu0 0.0
      %770 = vmatpush1.msra.mxu0 0.0
      %771 = vmatprep.subr.mxu0 0.0
      %772 = vmatpush1.msra.mxu0 0.0
      %773 = vmatprep.subr.mxu0 0.0
      %774 = vmatpush1.msra.mxu0 %v742
      %775 = vmatprep.subr.mxu0 0.0
      %776 = vmatpush1.msra.mxu0 %v737
      %777 = vmatprep.subr.mxu0 0.0
      %778 = vmatpush2.msra.mxu0 0.0
      %779 = vmatprep.subr.mxu0 0.0
      %780 = vmatpush2.msra.mxu0 0.0
      %781 = vmatprep.subr.mxu0 0.0
      %782 = vmatpush2.msra.mxu0 0.0
      %783 = vmatprep.subr.mxu0 0.0
      %784 = vmatpush2.msra.mxu0 0.0
      %785 = vmatprep.subr.mxu0 0.0
      %786 = vmatpush2.msra.mxu0 0.0
      %787 = vmatprep.subr.mxu0 0.0
      %788 = vmatpush2.msra.mxu0 0.0
      %789 = vmatprep.subr.mxu0 0.0
      %790 = vmatpush2.msra.mxu0 0.0
      %791 = vmatprep.subr.mxu0 0.0
      %792 = vmatpush2.msra.mxu0 0.0
      %793 = vmatprep.subr.mxu0 0.0
      %794 = vmatpush2.msra.mxu0 0.0
      %795 = vmatprep.subr.mxu0 0.0
      %796 = vmatpush2.msra.mxu0 0.0
      %797 = vmatprep.subr.mxu0 0.0
      %798 = vmatpush2.msra.mxu0 0.0
      %799 = vmatprep.subr.mxu0 0.0
      %800 = vmatpush2.msra.mxu0 0.0
      %801 = vmatprep.subr.mxu0 0.0
      %802 = vmatpush2.msra.mxu0 0.0
      %803 = vmatprep.subr.mxu0 0.0
      %804 = vmatpush2.msra.mxu0 0.0
      %805 = vmatprep.subr.mxu0 0.0
      %806 = vmatpush2.msra.mxu0 0.0
      %807 = vmatprep.subr.mxu0 0.0
      %808 = vmatpush2.msra.mxu0 0.0
      %809 = vmatprep.mubr.f32.mxu0 0.0
      %810 = vmatmul.mubr.f32.gmra.mxu0 %v417
      %v811 = vpop.f32.mrf.mxu0
      %v812 = vadd.f32 0.0, %v811
      %v813 = vpop.f32.mrf.mxu0
      %814 = vmatprep.mubr.f32.mxu0 0.0
      %815 = vmatmul.mubr.f32.gmra.mxu0 %v420
      %v816 = vpop.f32.mrf.mxu0
      %v817 = vadd.f32 0.0, %v816
      %v818 = vpop.f32.mrf.mxu0
      %819 = vdwg.mxu0
      %v820 = vmul.f32 %v812, 0.95
      %v821 = vmul.f32 %v817, 0.95
      %v822 = vadd.f32 %v497, %v820
      %v823 = vadd.f32 %v498, %v821
      %s824 = scalar_lea.vmem %s4, 256
      %v825 = vld [vmem:[%s824] sm:$0xff]
      %v826 = vld [vmem:[%s824 + $0x8] sm:$0xff]
      %v827 = vld [vmem:[%s824 + $0x10] sm:$0xff]
      %v828 = vld [vmem:[%s824 + $0x18] sm:$0xff]
      %v829 = vld [vmem:[%s824 + $0x20] sm:$0xff]
      %v830 = vld [vmem:[%s824 + $0x28] sm:$0xff]
      %v831 = vld [vmem:[%s824 + $0x30] sm:$0xff]
      %v832 = vld [vmem:[%s824 + $0x38] sm:$0xff]
      %v833 = vld [vmem:[%s824 + $0x40] sm:$0xff]
      %v834 = vld [vmem:[%s824 + $0x48] sm:$0xff]
      %v835 = vld [vmem:[%s824 + $0x50] sm:$0xff]
      %v836 = vld [vmem:[%s824 + $0x58] sm:$0xff]
      %v837 = vld [vmem:[%s824 + $0x60] sm:$0xff]
      %v838 = vld [vmem:[%s824 + $0x68] sm:$0xff]
      %v839 = vld [vmem:[%s824 + $0x70] sm:$0xff]
      %v840 = vld [vmem:[%s824 + $0x78] sm:$0xff]
      %841 = vmatprep.subr.mxu0 0.0
      %842 = vmatpush1.msra.mxu0 %v840
      %843 = vmatprep.subr.mxu0 0.0
      %844 = vmatpush1.msra.mxu0 %v839
      %845 = vmatprep.subr.mxu0 0.0
      %846 = vmatpush1.msra.mxu0 %v838
      %847 = vmatprep.subr.mxu0 0.0
      %848 = vmatpush1.msra.mxu0 %v837
      %849 = vmatprep.subr.mxu0 0.0
      %850 = vmatpush1.msra.mxu0 %v836
      %851 = vmatprep.subr.mxu0 0.0
      %852 = vmatpush1.msra.mxu0 %v835
      %853 = vmatprep.subr.mxu0 0.0
      %854 = vmatpush1.msra.mxu0 %v834
      %855 = vmatprep.subr.mxu0 0.0
      %856 = vmatpush1.msra.mxu0 %v833
      %857 = vmatprep.subr.mxu0 0.0
      %858 = vmatpush1.msra.mxu0 %v832
      %859 = vmatprep.subr.mxu0 0.0
      %860 = vmatpush1.msra.mxu0 %v831
      %861 = vmatprep.subr.mxu0 0.0
      %862 = vmatpush1.msra.mxu0 %v830
      %863 = vmatprep.subr.mxu0 0.0
      %864 = vmatpush1.msra.mxu0 %v829
      %865 = vmatprep.subr.mxu0 0.0
      %866 = vmatpush1.msra.mxu0 %v828
      %867 = vmatprep.subr.mxu0 0.0
      %868 = vmatpush1.msra.mxu0 %v827
      %869 = vmatprep.subr.mxu0 0.0
      %870 = vmatpush1.msra.mxu0 %v826
      %871 = vmatprep.subr.mxu0 0.0
      %872 = vmatpush1.msra.mxu0 %v825
      %873 = vmatprep.subr.mxu0 0.0
      %874 = vmatpush2.msra.mxu0 0.0
      %875 = vmatprep.subr.mxu0 0.0
      %876 = vmatpush2.msra.mxu0 0.0
      %877 = vmatprep.subr.mxu0 0.0
      %878 = vmatpush2.msra.mxu0 0.0
      %879 = vmatprep.subr.mxu0 0.0
      %880 = vmatpush2.msra.mxu0 0.0
      %881 = vmatprep.subr.mxu0 0.0
      %882 = vmatpush2.msra.mxu0 0.0
      %883 = vmatprep.subr.mxu0 0.0
      %884 = vmatpush2.msra.mxu0 0.0
      %885 = vmatprep.subr.mxu0 0.0
      %886 = vmatpush2.msra.mxu0 0.0
      %887 = vmatprep.subr.mxu0 0.0
      %888 = vmatpush2.msra.mxu0 0.0
      %889 = vmatprep.subr.mxu0 0.0
      %890 = vmatpush2.msra.mxu0 0.0
      %891 = vmatprep.subr.mxu0 0.0
      %892 = vmatpush2.msra.mxu0 0.0
      %893 = vmatprep.subr.mxu0 0.0
      %894 = vmatpush2.msra.mxu0 0.0
      %895 = vmatprep.subr.mxu0 0.0
      %896 = vmatpush2.msra.mxu0 0.0
      %897 = vmatprep.subr.mxu0 0.0
      %898 = vmatpush2.msra.mxu0 0.0
      %899 = vmatprep.subr.mxu0 0.0
      %900 = vmatpush2.msra.mxu0 0.0
      %901 = vmatprep.subr.mxu0 0.0
      %902 = vmatpush2.msra.mxu0 0.0
      %903 = vmatprep.subr.mxu0 0.0
      %904 = vmatpush2.msra.mxu0 0.0
      %905 = vmatprep.mubr.f32.mxu0 0.0
      %906 = vmatmul.mubr.f32.gmra.mxu0 %v822
      %v907 = vpop.f32.mrf.mxu0
      %v908 = vadd.f32 0.0, %v907
      %v909 = vpop.f32.mrf.mxu0
      %910 = vmatprep.mubr.f32.mxu0 0.0
      %911 = vmatmul.mubr.f32.gmra.mxu0 %v823
      %v912 = vpop.f32.mrf.mxu0
      %v913 = vadd.f32 0.0, %v912
      %v914 = vpop.f32.mrf.mxu0
      %915 = vdwg.mxu0
      %v916 = vadd.f32 %v662, %v908
      %v917 = vadd.f32 %v667, %v913
      %v918 = vld [vmem:[%s5] sm:$0x1]
      %v920 = vlaneseq
      %v921 = vshrl.u32 %v920, 7
      %v922 = vsub.s32 0, %v921
      %v923 = vrot.slane %v918, %v922
      %v925 = vadd.f32 %v916, %v923
      %v926 = vadd.f32 %v917, %v923
      %927 = vst [vmem:[%s271] sm:$0xff] %v925
      %928 = vst [vmem:[%s271 + $0x8] sm:$0xff] %v926
      %p929 = scmp.lt.s32.totalorder %s17, 1
      %s930 = scalar_select %p929, %s17, 1
      %s931 = smul.addr %s930, 2
      %s932 = smul.addr %s931, 8
      %s933 = scalar_lea.vmem %s6, %s932
      // Predicated region
      $region45: #{residualconv_forward.1} parent=43 // pred_check
        %p934 = pneg %p171
      $region46: #{residualconv_forward.1} parent=43 // pred_check_branch
        %936 = sbr.rel (%p934) target = $region48
      $region47: #{residualconv_forward.1} parent=43 // pred_region
        _
      $region48: #{residualconv_forward.1} parent=43 // pred_fallthru
        _
    $region44: #{residualconv_forward.1} parent=5 // pred_fallthru
      _
    %p937 = scmp.le.s32.totalorder 2, %s12
    // Predicated region
    $region49: #{residualconv_forward.1} parent=5 // pred_check
      %p938 = pneg %p937
    $region50: #{residualconv_forward.1} parent=5 // pred_check_branch
      %940 = sbr.rel (%p938) target = $region52
    $region51: #{residualconv_forward.1} parent=5 // pred_region
      %s941 = ssub.s32 %s12, 2
      // Predicated region
      $region53: #{residualconv_forward.1} parent=51 // pred_check
        %p942 = pneg %p177
      $region54: #{residualconv_forward.1} parent=51 // pred_check_branch
        %944 = sbr.rel (%p942) target = $region56
      $region55: #{residualconv_forward.1} parent=51 // pred_region
        %p945 = scmp.lt.s32.totalorder %s18, 1
        %s946 = scalar_select %p945, %s18, 1
        %s947 = smul.addr %s946, 2
        %s948 = smul.addr %s947, 8
        %s949 = scalar_lea.vmem %s6, %s948
      $region56: #{residualconv_forward.1} parent=51 // pred_fallthru
        _
    $region52: #{residualconv_forward.1} parent=5 // pred_fallthru
      _
  $region6: #{residualconv_forward.1} parent=0 // loop_footer
    %s16 = sadd.s32 1, %s12
  $region7: #{residualconv_forward.1} parent=0 // loop_footer_branch
    %11 = sbr.rel target = $region3
  $region8: #{residualconv_forward.1} parent=0 // loop_exit
    _

</llo_original>
